<compile_context>
chip_gen: v7x
topology: tpu7x:2x2x1
jax: 0.10.0
libtpu: 0.0.40
codegen_flags: <defaults>
</compile_context>

<pallas_src>
import functools
import math

import jax
import jax.numpy as jnp
from jax.experimental import pallas as pl
from jax.experimental.pallas import tpu as pltpu


_SQRT_HALF = 0.7071067811865476        # 1/sqrt(2)
_SQRT_2_OVER_PI = 0.7978845608028654   # sqrt(2/pi)


def _gelu_erf(x):
    # UER gelu: x * 0.5 * (1 + erf(x / sqrt(2)))
    return x * 0.5 * (1.0 + jax.lax.erf(x * _SQRT_HALF))


def _gelu_tanh(x):
    # tanh approximation — routes the transcendental to the EUP slot.
    return 0.5 * x * (1.0 + jnp.tanh(_SQRT_2_OVER_PI * (x + 0.044715 * x * x * x)))


def _ffn_kernel(x_ref, w1_ref, b1_ref, w2_ref, b2_ref, o_ref, acc_ref, *,
                hidden_act, approx_gelu):
    # x_ref: (tm, H), w1_ref: (H, tf), b1_ref: (1, tf) [or (1, F) when resident],
    # w2_ref: (tf, H), b2_ref: (1, H), o_ref: (tm, H), acc_ref: (tm, H) f32
    f = pl.program_id(1)

    @pl.when(f == 0)
    def _init():
        # Fold b2 into the accumulator init — no per-step broadcast add.
        acc_ref[...] = jnp.broadcast_to(
            b2_ref[...].astype(jnp.float32), acc_ref.shape)

    x = x_ref[...]
    h = jnp.dot(x, w1_ref[...], preferred_element_type=jnp.float32)
    h = h + b1_ref[...].astype(jnp.float32)
    if hidden_act == "gelu":
        h = _gelu_tanh(h) if approx_gelu else _gelu_erf(h)
    else:  # relu
        h = jnp.maximum(h, 0.0)

    acc_ref[...] += jnp.dot(h.astype(w2_ref.dtype), w2_ref[...],
                            preferred_element_type=jnp.float32)

    @pl.when(f == pl.num_programs(1) - 1)
    def _finalize():
        o_ref[...] = acc_ref[...].astype(o_ref.dtype)


def _round_up(n, m):
    return ((n + m - 1) // m) * m


def _cdiv(a, b):
    return -(-a // b)


def _device_vmem_bytes():
    """Per-core VMEM capacity (falls back to a v7x-safe 64 MiB)."""
    try:
        cap = getattr(pltpu.get_tpu_info(), "vmem_capacity_bytes", None)
        if cap:
            return int(cap)
    except Exception:
        pass
    return 64 * 1024 * 1024


def _vmem_bytes(tm, tf, h, ff, in_dsize, out_dsize):
    """Conservative footprint (assumes double buffering for every operand)."""
    x_b = 2 * tm * h * in_dsize
    o_b = 2 * tm * h * out_dsize
    w1_b = 2 * h * tf * in_dsize
    w2_b = 2 * tf * h * in_dsize
    b1_b = 2 * 8 * _round_up(ff, 128) * 4
    b2_b = 2 * 8 * _round_up(h, 128) * 4
    acc_b = tm * h * 4
    return x_b + o_b + w1_b + w2_b + b1_b + b2_b + acc_b


def _pick_tf(ff, tf_req):
    """Largest divisor of F that's a multiple of 256 (else 128) and <= tf_req."""
    if ff % 128 != 0:
        return ff
    tf_req = max(128, min(int(tf_req), ff))
    for align in (256, 128):
        c = (tf_req // align) * align
        while c >= align:
            if ff % c == 0:
                return c
            c -= align
    return ff


def positionwise_feed_forward(x, w1, b1, w2, b2, *, hidden_act="gelu",
                              mxu_dtype=jnp.bfloat16, approx_gelu=False,
                              tm=None, tf=None):
    """x: [batch, seq, hidden]; w1: [hidden, ff]; b1: [ff]; w2: [ff, hidden]; b2: [hidden].

    Weights are stored pre-transposed as [in, out] so the kernel does x @ W
    (same math as PyTorch nn.Linear).  `mxu_dtype` is the matmul-operand dtype
    (bf16 default for native MXU speed and half the weight DMA bytes; pass
    jnp.float32 for bit-level parity with the f32 module).  Accumulation and
    bias adds are always float32.
    """
    if hidden_act not in ("relu", "gelu"):
        raise ValueError("Actvation function should be relu or gelu.")

    B, S, H = x.shape
    Hf, F = w1.shape
    assert Hf == H and w2.shape == (F, H) and b1.shape == (F,) and b2.shape == (H,)
    M = B * S

    out_dtype = x.dtype
    mxu_dtype = jnp.dtype(mxu_dtype)
    in_dsize = mxu_dtype.itemsize
    out_dsize = jnp.dtype(out_dtype).itemsize

    x2d = x.reshape(M, H).astype(mxu_dtype)
    w1c = w1.astype(mxu_dtype)
    w2c = w2.astype(mxu_dtype)
    b1_2d = b1.reshape(1, F).astype(jnp.float32)
    b2_2d = b2.reshape(1, H).astype(jnp.float32)

    # ---------------------------- tile sizing ------------------------------
    vmem_cap = _device_vmem_bytes()
    budget = int(vmem_cap * 0.70)                 # ~90 MiB v5e/v6e, ~45 MiB v7x
    multi_core = vmem_cap <= 64 * 1024 * 1024     # v7x proxy: 2 TCs share the chip

    pack = max(8, 32 // in_dsize)                 # sublane pack: 8 f32 / 16 bf16 / 32 i8
    tm_cap = max(pack, min(1024, _round_up(M, pack)))

    def fits(tm_v, tf_v):
        return _vmem_bytes(tm_v, tf_v, H, F, in_dsize, out_dsize) <= budget

    # Feedforward-dim tiling: prefer resident weights (tf == F -> W1/W2 DMA'd once).
    if tf is None:
        probe_tm = min(tm_cap, _round_up(128, pack))
        tf_sel = F if fits(probe_tm, F) else _pick_tf(F, 512)
    else:
        tf_sel = int(tf)
        if tf_sel >= F or F % tf_sel != 0 or tf_sel % 128 != 0:
            tf_sel = F if (tf_sel >= F or F % 128 != 0) else _pick_tf(F, tf_sel)

    # Row tiling: start from the request (or 256) and GROW toward the budget.
    if tm is None:
        tm_sel = min(tm_cap, _round_up(256, pack))
        while tm_sel * 2 <= tm_cap and fits(tm_sel * 2, tf_sel):
            tm_sel *= 2
    else:
        tm_sel = max(pack, min(tm_cap, _round_up(int(tm), pack)))

    # Shrink to fit: tm down to 64 first, then tf (keep >=256 contraction depth
    # for the full-width MXU on v6e/v7x), then last-resort tm / tf.
    while not fits(tm_sel, tf_sel) and tm_sel > max(pack, 64):
        tm_sel = max(pack, _round_up(tm_sel // 2, pack))
    while (not fits(tm_sel, tf_sel) and tf_sel // 2 >= 256
           and tf_sel % 2 == 0 and F % (tf_sel // 2) == 0
           and (tf_sel // 2) % 128 == 0):
        tf_sel //= 2
    while not fits(tm_sel, tf_sel) and tm_sel > pack:
        tm_sel = max(pack, _round_up(tm_sel // 2, pack))
    while (not fits(tm_sel, tf_sel) and tf_sel > 128
           and tf_sel % 2 == 0 and F % (tf_sel // 2) == 0
           and (tf_sel // 2) % 128 == 0):
        tf_sel //= 2

    # Multi-TensorCore chips (v7x): keep both cores busy on the parallel row axis.
    if multi_core and M > pack:
        n_rows = _cdiv(M, tm_sel)
        if n_rows < 2:
            tm_sel = max(pack, _round_up(_cdiv(M, 2), pack))
        elif n_rows % 2 == 1:
            cand = _round_up(_cdiv(M, n_rows + 1), pack)
            if cand >= pack and _cdiv(M, cand) % 2 == 0 and fits(cand, tf_sel):
                tm_sel = cand

    n_rows = _cdiv(M, tm_sel)
    n_f = F // tf_sel
    grid = (n_rows, n_f)
    resident_weights = (n_f == 1)

    est = _vmem_bytes(tm_sel, tf_sel, H, F, in_dsize, out_dsize)
    vmem_limit = max(32 * 1024 * 1024, min(est * 3 // 2, int(vmem_cap * 0.90)))
    vmem_limit = int(min(max(vmem_limit, est + (2 << 20)), int(vmem_cap * 0.95)))

    cost = pl.CostEstimate(
        flops=4 * M * H * F,
        transcendentals=(M * F if hidden_act == "gelu" else 0),
        bytes_accessed=(M * H + H * F + F * H) * in_dsize
                       + (F + H) * 4 + M * H * out_dsize,
    )

    kernel = functools.partial(_ffn_kernel, hidden_act=hidden_act,
                               approx_gelu=approx_gelu)

    def _build(single_buffer):
        def spec(shape, index_map, constant_block):
            if single_buffer and constant_block and hasattr(pl, "Buffered"):
                return pl.BlockSpec(shape, index_map, pipeline_mode=pl.Buffered(1))
            return pl.BlockSpec(shape, index_map)

        # TODO(synk): in streaming mode b1 could be one resident (1, F) block
        # sliced in-kernel with pl.ds; kept chunked for lowering robustness.
        b1_spec = (spec((1, F), lambda i, f: (0, 0), True) if resident_weights
                   else spec((1, tf_sel), lambda i, f: (0, f), False))

        in_specs = [
            spec((tm_sel, H), lambda i, f: (i, 0), False),             # x row tile
            spec((H, tf_sel), lambda i, f: (0, f), resident_weights),  # W1 chunk
            b1_spec,                                                   # b1
            spec((tf_sel, H), lambda i, f: (f, 0), resident_weights),  # W2 chunk
            spec((1, H), lambda i, f: (0, 0), True),                   # b2
        ]
        return pl.pallas_call(
            kernel,
            out_shape=jax.ShapeDtypeStruct((M, H), out_dtype),
            grid_spec=pltpu.PrefetchScalarGridSpec(
                num_scalar_prefetch=0,
                grid=grid,
                in_specs=in_specs,
                out_specs=pl.BlockSpec((tm_sel, H), lambda i, f: (i, 0)),
                scratch_shapes=[pltpu.VMEM((tm_sel, H), jnp.float32)],
            ),
            compiler_params=pltpu.CompilerParams(
                dimension_semantics=("parallel", "arbitrary"),
                vmem_limit_bytes=vmem_limit,
            ),
            cost_estimate=cost,
        )

    args = (x2d, w1c, b1_2d, w2c, b2_2d)
    try:
        out2d = _build(True)(*args)
    except Exception:
        # JAX build without single-buffer pipeline_mode support: fall back to
        # default double buffering (identical results, slightly more VMEM).
        out2d = _build(False)(*args)

    return out2d.reshape(B, S, H)


# ----------------------------- reference & test -----------------------------

def _reference(x, w1, b1, w2, b2, hidden_act="gelu"):
    h = jnp.dot(x, w1) + b1
    h = _gelu_erf(h) if hidden_act == "gelu" else jnp.maximum(h, 0.0)
    return jnp.dot(h, w2) + b2


def _make_params(key, hidden_size, feedforward_size):
    k1, k2, k3, k4 = jax.random.split(key, 4)
    lim1 = 1.0 / math.sqrt(hidden_size)
    lim2 = 1.0 / math.sqrt(feedforward_size)
    w1 = jax.random.uniform(k1, (hidden_size, feedforward_size),
                            minval=-lim1, maxval=lim1, dtype=jnp.float32)
    b1 = jax.random.uniform(k2, (feedforward_size,),
                            minval=-lim1, maxval=lim1, dtype=jnp.float32)
    w2 = jax.random.uniform(k3, (feedforward_size, hidden_size),
                            minval=-lim2, maxval=lim2, dtype=jnp.float32)
    b2 = jax.random.uniform(k4, (hidden_size,),
                            minval=-lim2, maxval=lim2, dtype=jnp.float32)
    return w1, b1, w2, b2


if __name__ == "__main__":
    key = jax.random.PRNGKey(0)

    # --- Case 1: small shapes, f32 MXU, resident weights, erf gelu ----------
    batch, seq, hidden_size, feedforward_size = 2, 8, 32, 64
    kx, kp, krest = jax.random.split(key, 3)
    x = jax.random.normal(kx, (batch, seq, hidden_size), dtype=jnp.float32)
    w1, b1, w2, b2 = _make_params(kp, hidden_size, feedforward_size)

    out = positionwise_feed_forward(x, w1, b1, w2, b2, hidden_act="gelu",
                                    mxu_dtype=jnp.float32)
    out = jax.block_until_ready(out)
    ref = _reference(x, w1, b1, w2, b2, hidden_act="gelu")
    assert out.shape == x.shape
    assert jnp.allclose(out, ref, atol=1e-4, rtol=1e-4), "mismatch (case 1)"

    # --- Case 1b: tanh-approx gelu path (EUP) --------------------------------
    out1b = positionwise_feed_forward(x, w1, b1, w2, b2, hidden_act="gelu",
                                      mxu_dtype=jnp.float32, approx_gelu=True)
    out1b = jax.block_until_ready(out1b)
    assert jnp.allclose(out1b, ref, atol=2e-2, rtol=2e-2), "mismatch (case 1b)"

    # --- Case 2: row tiling + F-reduction accumulator path (streamed weights)
    batch, seq, hidden_size, feedforward_size = 2, 64, 256, 512
    kx2, kp2, krest = jax.random.split(krest, 3)
    x2 = jax.random.normal(kx2, (batch, seq, hidden_size), dtype=jnp.float32)
    w1b, b1b, w2b, b2b = _make_params(kp2, hidden_size, feedforward_size)

    out2 = positionwise_feed_forward(x2, w1b, b1b, w2b, b2b, hidden_act="gelu",
                                     mxu_dtype=jnp.float32, tm=64, tf=128)
    out2 = jax.block_until_ready(out2)
    ref2 = _reference(x2, w1b, b1b, w2b, b2b, hidden_act="gelu")
    assert out2.shape == x2.shape
    assert jnp.allclose(out2, ref2, atol=1e-4, rtol=1e-4), "mismatch (case 2)"

    # --- Case 3: bf16 default path, relu, ragged last row tile ---------------
    batch, seq, hidden_size, feedforward_size = 2, 40, 128, 256
    kx3, kp3 = jax.random.split(krest)
    x3 = jax.random.normal(kx3, (batch, seq, hidden_size),
                           dtype=jnp.float32).astype(jnp.bfloat16)
    w1c_, b1c_, w2c_, b2c_ = _make_params(kp3, hidden_size, feedforward_size)

    out3 = positionwise_feed_forward(x3, w1c_, b1c_, w2c_, b2c_,
                                     hidden_act="relu", tm=32)
    out3 = jax.block_until_ready(out3)
    ref3 = _reference(x3.astype(jnp.float32), w1c_, b1c_, w2c_, b2c_,
                      hidden_act="relu")
    assert out3.shape == x3.shape
    assert jnp.allclose(out3.astype(jnp.float32), ref3, atol=5e-2, rtol=5e-2), \
        "mismatch (case 3)"

    print("KERNEL_OK")
</pallas_src>

<mosaic_0001>
module attributes {stable_mosaic.version = 11 : i64} {
  func.func @_ffn_kernel(%arg0: i32, %arg1: i32, %arg2: memref<8x32xf32, #tpu.memory_space<vmem>>, %arg3: memref<32x64xf32, #tpu.memory_space<vmem>>, %arg4: memref<1x64xf32, #tpu.memory_space<vmem>>, %arg5: memref<64x32xf32, #tpu.memory_space<vmem>>, %arg6: memref<1x32xf32, #tpu.memory_space<vmem>>, %arg7: memref<8x32xf32, #tpu.memory_space<vmem>>, %arg8: memref<8x32xf32, #tpu.memory_space<vmem>>) attributes {dimension_semantics = [#tpu.dimension_semantics<parallel>, #tpu.dimension_semantics<arbitrary>], iteration_bounds = array<i64: 2, 1>, scalar_prefetch = 0 : i64, scratch_operands = 1 : i64, tpu.core_type = #tpu.core_type<tc>, window_params = [{transform_indices = @transform_0, window_bounds = array<i64: 8, 32>}, {pipeline_mode = #tpu.pipeline_mode<synchronous>, transform_indices = @transform_1, window_bounds = array<i64: 32, 64>}, {pipeline_mode = #tpu.pipeline_mode<synchronous>, transform_indices = @transform_2, window_bounds = array<i64: 1, 64>}, {pipeline_mode = #tpu.pipeline_mode<synchronous>, transform_indices = @transform_3, window_bounds = array<i64: 64, 32>}, {pipeline_mode = #tpu.pipeline_mode<synchronous>, transform_indices = @transform_4, window_bounds = array<i64: 1, 32>}, {transform_indices = @transform_5, window_bounds = array<i64: 8, 32>}]} {
    %c0_i32 = arith.constant 0 : i32
    %0 = arith.cmpi eq, %arg1, %c0_i32 : i32
    %1 = arith.extui %0 : i1 to i32
    %c0_i32_0 = arith.constant 0 : i32
    %2 = arith.cmpi ne, %1, %c0_i32_0 : i32
    scf.if %2 {
      %c0_18 = arith.constant 0 : index
      %c0_19 = arith.constant 0 : index
      %25 = vector.load %arg6[%c0_18, %c0_19] : memref<1x32xf32, #tpu.memory_space<vmem>>, vector<1x32xf32>
      %26 = vector.shape_cast %25 : vector<1x32xf32> to vector<1x32xf32>
      %27 = vector.broadcast %26 : vector<1x32xf32> to vector<8x32xf32>
      %c0_20 = arith.constant 0 : index
      %c0_21 = arith.constant 0 : index
      %28 = vector.load %arg8[%c0_20, %c0_21] : memref<8x32xf32, #tpu.memory_space<vmem>>, vector<8x32xf32>
      tpu.vector_store %arg8[%c0_20, %c0_21], %27 {strides = array<i32>} : memref<8x32xf32, #tpu.memory_space<vmem>>, vector<8x32xf32>,
    } else {
    }
    %c0 = arith.constant 0 : index
    %c0_1 = arith.constant 0 : index
    %3 = vector.load %arg2[%c0, %c0_1] : memref<8x32xf32, #tpu.memory_space<vmem>>, vector<8x32xf32>
    %c0_2 = arith.constant 0 : index
    %c0_3 = arith.constant 0 : index
    %4 = vector.load %arg3[%c0_2, %c0_3] : memref<32x64xf32, #tpu.memory_space<vmem>>, vector<32x64xf32>
    %cst = arith.constant dense<0.000000e+00> : vector<8x64xf32>
    %5 = tpu.matmul %3, %4, %cst {dimension_numbers = #tpu.dot_dimension_numbers<[1], [0], [0], [1], [0, 0, 1, 1], [], []>} : vector<8x32xf32>, vector<32x64xf32>, vector<8x64xf32> -> vector<8x64xf32>
    %c0_4 = arith.constant 0 : index
    %c0_5 = arith.constant 0 : index
    %6 = vector.load %arg4[%c0_4, %c0_5] : memref<1x64xf32, #tpu.memory_space<vmem>>, vector<1x64xf32>
    %7 = vector.broadcast %6 : vector<1x64xf32> to vector<8x64xf32>
    %8 = arith.addf %5, %7 : vector<8x64xf32>
    %cst_6 = arith.constant 5.000000e-01 : f32
    %9 = vector.broadcast %cst_6 : f32 to vector<8x64xf32>
    %10 = arith.mulf %8, %9 : vector<8x64xf32>
    %cst_7 = arith.constant 0.707106769 : f32
    %11 = vector.broadcast %cst_7 : f32 to vector<8x64xf32>
    %12 = arith.mulf %8, %11 : vector<8x64xf32>
    %13 = math.erf %12 : vector<8x64xf32>
    %cst_8 = arith.constant 1.000000e+00 : f32
    %14 = vector.broadcast %cst_8 : f32 to vector<8x64xf32>
    %15 = arith.addf %14, %13 : vector<8x64xf32>
    %16 = arith.mulf %10, %15 : vector<8x64xf32>
    %c0_9 = arith.constant 0 : index
    %c0_10 = arith.constant 0 : index
    %17 = vector.load %arg8[%c0_9, %c0_10] : memref<8x32xf32, #tpu.memory_space<vmem>>, vector<8x32xf32>
    %c0_11 = arith.constant 0 : index
    %c0_12 = arith.constant 0 : index
    %18 = vector.load %arg5[%c0_11, %c0_12] : memref<64x32xf32, #tpu.memory_space<vmem>>, vector<64x32xf32>
    %cst_13 = arith.constant dense<0.000000e+00> : vector<8x32xf32>
    %19 = tpu.matmul %16, %18, %cst_13 {dimension_numbers = #tpu.dot_dimension_numbers<[1], [0], [0], [1], [0, 0, 1, 1], [], []>} : vector<8x64xf32>, vector<64x32xf32>, vector<8x32xf32> -> vector<8x32xf32>
    %20 = arith.addf %17, %19 : vector<8x32xf32>
    %c0_14 = arith.constant 0 : index
    %c0_15 = arith.constant 0 : index
    %21 = vector.load %arg8[%c0_14, %c0_15] : memref<8x32xf32, #tpu.memory_space<vmem>>, vector<8x32xf32>
    tpu.vector_store %arg8[%c0_14, %c0_15], %20 {strides = array<i32>} : memref<8x32xf32, #tpu.memory_space<vmem>>, vector<8x32xf32>,
    %c0_i32_16 = arith.constant 0 : i32
    %22 = arith.cmpi eq, %arg1, %c0_i32_16 : i32
    %23 = arith.extui %22 : i1 to i32
    %c0_i32_17 = arith.constant 0 : i32
    %24 = arith.cmpi ne, %23, %c0_i32_17 : i32
    scf.if %24 {
      %c0_18 = arith.constant 0 : index
      %c0_19 = arith.constant 0 : index
      %25 = vector.load %arg8[%c0_18, %c0_19] : memref<8x32xf32, #tpu.memory_space<vmem>>, vector<8x32xf32>
      %c0_20 = arith.constant 0 : index
      %c0_21 = arith.constant 0 : index
      %26 = vector.load %arg7[%c0_20, %c0_21] : memref<8x32xf32, #tpu.memory_space<vmem>>, vector<8x32xf32>
      tpu.vector_store %arg7[%c0_20, %c0_21], %25 {strides = array<i32>} : memref<8x32xf32, #tpu.memory_space<vmem>>, vector<8x32xf32>,
    } else {
    }
    return
  }
  func.func @transform_0(%arg0: i32, %arg1: i32) -> (i32, i32) {
    %c0_i32 = arith.constant 0 : i32
    %c0_i32_0 = arith.constant 0 : i32
    return %arg0, %c0_i32 : i32, i32
  }
  func.func @transform_1(%arg0: i32, %arg1: i32) -> (i32, i32) {
    %c0_i32 = arith.constant 0 : i32
    %c0_i32_0 = arith.constant 0 : i32
    return %c0_i32, %arg1 : i32, i32
  }
  func.func @transform_2(%arg0: i32, %arg1: i32) -> (i32, i32) {
    %c0_i32 = arith.constant 0 : i32
    %c0_i32_0 = arith.constant 0 : i32
    %c0_i32_1 = arith.constant 0 : i32
    return %c0_i32, %c0_i32_0 : i32, i32
  }
  func.func @transform_3(%arg0: i32, %arg1: i32) -> (i32, i32) {
    %c0_i32 = arith.constant 0 : i32
    %c0_i32_0 = arith.constant 0 : i32
    return %arg1, %c0_i32 : i32, i32
  }
  func.func @transform_4(%arg0: i32, %arg1: i32) -> (i32, i32) {
    %c0_i32 = arith.constant 0 : i32
    %c0_i32_0 = arith.constant 0 : i32
    %c0_i32_1 = arith.constant 0 : i32
    return %c0_i32, %c0_i32_0 : i32, i32
  }
  func.func @transform_5(%arg0: i32, %arg1: i32) -> (i32, i32) {
    %c0_i32 = arith.constant 0 : i32
    %c0_i32_0 = arith.constant 0 : i32
    return %arg0, %c0_i32 : i32, i32
  }
}

module attributes {stable_mosaic.version = 11 : i64} {
  func.func @_ffn_kernel(%arg0: i32, %arg1: i32, %arg2: memref<8x32xf32, #tpu.memory_space<vmem>>, %arg3: memref<32x64xf32, #tpu.memory_space<vmem>>, %arg4: memref<1x64xf32, #tpu.memory_space<vmem>>, %arg5: memref<64x32xf32, #tpu.memory_space<vmem>>, %arg6: memref<1x32xf32, #tpu.memory_space<vmem>>, %arg7: memref<8x32xf32, #tpu.memory_space<vmem>>, %arg8: memref<8x32xf32, #tpu.memory_space<vmem>>) attributes {dimension_semantics = [#tpu.dimension_semantics<parallel>, #tpu.dimension_semantics<arbitrary>], iteration_bounds = array<i64: 2, 1>, scalar_prefetch = 0 : i64, scratch_operands = 1 : i64, tpu.core_type = #tpu.core_type<tc>, window_params = [{transform_indices = @transform_0, window_bounds = array<i64: 8, 32>}, {transform_indices = @transform_1, window_bounds = array<i64: 32, 64>}, {pipeline_mode = #tpu.pipeline_mode<synchronous>, transform_indices = @transform_2, window_bounds = array<i64: 1, 64>}, {transform_indices = @transform_3, window_bounds = array<i64: 64, 32>}, {pipeline_mode = #tpu.pipeline_mode<synchronous>, transform_indices = @transform_4, window_bounds = array<i64: 1, 32>}, {transform_indices = @transform_5, window_bounds = array<i64: 8, 32>}]} {
    %c0_i32 = arith.constant 0 : i32
    %0 = arith.cmpi eq, %arg1, %c0_i32 : i32
    %1 = arith.extui %0 : i1 to i32
    %c0_i32_0 = arith.constant 0 : i32
    %2 = arith.cmpi ne, %1, %c0_i32_0 : i32
    scf.if %2 {
      %c0_18 = arith.constant 0 : index
      %c0_19 = arith.constant 0 : index
      %25 = vector.load %arg6[%c0_18, %c0_19] : memref<1x32xf32, #tpu.memory_space<vmem>>, vector<1x32xf32>
      %26 = vector.shape_cast %25 : vector<1x32xf32> to vector<1x32xf32>
      %27 = vector.broadcast %26 : vector<1x32xf32> to vector<8x32xf32>
      %c0_20 = arith.constant 0 : index
      %c0_21 = arith.constant 0 : index
      %28 = vector.load %arg8[%c0_20, %c0_21] : memref<8x32xf32, #tpu.memory_space<vmem>>, vector<8x32xf32>
      tpu.vector_store %arg8[%c0_20, %c0_21], %27 {strides = array<i32>} : memref<8x32xf32, #tpu.memory_space<vmem>>, vector<8x32xf32>,
    } else {
    }
    %c0 = arith.constant 0 : index
    %c0_1 = arith.constant 0 : index
    %3 = vector.load %arg2[%c0, %c0_1] : memref<8x32xf32, #tpu.memory_space<vmem>>, vector<8x32xf32>
    %c0_2 = arith.constant 0 : index
    %c0_3 = arith.constant 0 : index
    %4 = vector.load %arg3[%c0_2, %c0_3] : memref<32x64xf32, #tpu.memory_space<vmem>>, vector<32x64xf32>
    %cst = arith.constant dense<0.000000e+00> : vector<8x64xf32>
    %5 = tpu.matmul %3, %4, %cst {dimension_numbers = #tpu.dot_dimension_numbers<[1], [0], [0], [1], [0, 0, 1, 1], [], []>} : vector<8x32xf32>, vector<32x64xf32>, vector<8x64xf32> -> vector<8x64xf32>
    %c0_4 = arith.constant 0 : index
    %c0_5 = arith.constant 0 : index
    %6 = vector.load %arg4[%c0_4, %c0_5] : memref<1x64xf32, #tpu.memory_space<vmem>>, vector<1x64xf32>
    %7 = vector.broadcast %6 : vector<1x64xf32> to vector<8x64xf32>
    %8 = arith.addf %5, %7 : vector<8x64xf32>
    %cst_6 = arith.constant 5.000000e-01 : f32
    %9 = vector.broadcast %cst_6 : f32 to vector<8x64xf32>
    %10 = arith.mulf %8, %9 : vector<8x64xf32>
    %cst_7 = arith.constant 0.707106769 : f32
    %11 = vector.broadcast %cst_7 : f32 to vector<8x64xf32>
    %12 = arith.mulf %8, %11 : vector<8x64xf32>
    %13 = math.erf %12 : vector<8x64xf32>
    %cst_8 = arith.constant 1.000000e+00 : f32
    %14 = vector.broadcast %cst_8 : f32 to vector<8x64xf32>
    %15 = arith.addf %14, %13 : vector<8x64xf32>
    %16 = arith.mulf %10, %15 : vector<8x64xf32>
    %c0_9 = arith.constant 0 : index
    %c0_10 = arith.constant 0 : index
    %17 = vector.load %arg8[%c0_9, %c0_10] : memref<8x32xf32, #tpu.memory_space<vmem>>, vector<8x32xf32>
    %c0_11 = arith.constant 0 : index
    %c0_12 = arith.constant 0 : index
    %18 = vector.load %arg5[%c0_11, %c0_12] : memref<64x32xf32, #tpu.memory_space<vmem>>, vector<64x32xf32>
    %cst_13 = arith.constant dense<0.000000e+00> : vector<8x32xf32>
    %19 = tpu.matmul %16, %18, %cst_13 {dimension_numbers = #tpu.dot_dimension_numbers<[1], [0], [0], [1], [0, 0, 1, 1], [], []>} : vector<8x64xf32>, vector<64x32xf32>, vector<8x32xf32> -> vector<8x32xf32>
    %20 = arith.addf %17, %19 : vector<8x32xf32>
    %c0_14 = arith.constant 0 : index
    %c0_15 = arith.constant 0 : index
    %21 = vector.load %arg8[%c0_14, %c0_15] : memref<8x32xf32, #tpu.memory_space<vmem>>, vector<8x32xf32>
    tpu.vector_store %arg8[%c0_14, %c0_15], %20 {strides = array<i32>} : memref<8x32xf32, #tpu.memory_space<vmem>>, vector<8x32xf32>,
    %c0_i32_16 = arith.constant 0 : i32
    %22 = arith.cmpi eq, %arg1, %c0_i32_16 : i32
    %23 = arith.extui %22 : i1 to i32
    %c0_i32_17 = arith.constant 0 : i32
    %24 = arith.cmpi ne, %23, %c0_i32_17 : i32
    scf.if %24 {
      %c0_18 = arith.constant 0 : index
      %c0_19 = arith.constant 0 : index
      %25 = vector.load %arg8[%c0_18, %c0_19] : memref<8x32xf32, #tpu.memory_space<vmem>>, vector<8x32xf32>
      %c0_20 = arith.constant 0 : index
      %c0_21 = arith.constant 0 : index
      %26 = vector.load %arg7[%c0_20, %c0_21] : memref<8x32xf32, #tpu.memory_space<vmem>>, vector<8x32xf32>
      tpu.vector_store %arg7[%c0_20, %c0_21], %25 {strides = array<i32>} : memref<8x32xf32, #tpu.memory_space<vmem>>, vector<8x32xf32>,
    } else {
    }
    return
  }
  func.func @transform_0(%arg0: i32, %arg1: i32) -> (i32, i32) {
    %c0_i32 = arith.constant 0 : i32
    %c0_i32_0 = arith.constant 0 : i32
    return %arg0, %c0_i32 : i32, i32
  }
  func.func @transform_1(%arg0: i32, %arg1: i32) -> (i32, i32) {
    %c0_i32 = arith.constant 0 : i32
    %c0_i32_0 = arith.constant 0 : i32
    return %c0_i32, %arg1 : i32, i32
  }
  func.func @transform_2(%arg0: i32, %arg1: i32) -> (i32, i32) {
    %c0_i32 = arith.constant 0 : i32
    %c0_i32_0 = arith.constant 0 : i32
    %c0_i32_1 = arith.constant 0 : i32
    return %c0_i32, %c0_i32_0 : i32, i32
  }
  func.func @transform_3(%arg0: i32, %arg1: i32) -> (i32, i32) {
    %c0_i32 = arith.constant 0 : i32
    %c0_i32_0 = arith.constant 0 : i32
    return %arg1, %c0_i32 : i32, i32
  }
  func.func @transform_4(%arg0: i32, %arg1: i32) -> (i32, i32) {
    %c0_i32 = arith.constant 0 : i32
    %c0_i32_0 = arith.constant 0 : i32
    %c0_i32_1 = arith.constant 0 : i32
    return %c0_i32, %c0_i32_0 : i32, i32
  }
  func.func @transform_5(%arg0: i32, %arg1: i32) -> (i32, i32) {
    %c0_i32 = arith.constant 0 : i32
    %c0_i32_0 = arith.constant 0 : i32
    return %arg0, %c0_i32 : i32, i32
  }
}

</mosaic_0001>

<llo_original>
// kernel: tpu_custom_call.1
$region0: #{tpu_custom_call.1}
  #allocation0 [shape = 'u32[]', space=smem, size = 0x4, offset = 0x4, fixed_abs, tag = 'smem constant byte address 0x4 - core index']
  #allocation1 [shape = 'u32[144,128]{1,0:T(1,128)}', space=vmem, size = 0x12000, scoped, tag = 'internal scratch']
  #allocation2 [shape = 'f32[8,32]{1,0:T(8,128)}', space=vmem, size = 0x1000, scoped, tag = 'scratch operand']
  %s0 = inlined_call_operand.vmem [shape: f32[16,32], index: 0, kind: input, shape index: {}]
  %s1 = inlined_call_operand.vmem [shape: f32[32,64], index: 1, kind: input, shape index: {}]
  %s2 = inlined_call_operand.vmem [shape: f32[1,64], index: 2, kind: input, shape index: {}]
  %s3 = inlined_call_operand.vmem [shape: f32[64,32], index: 3, kind: input, shape index: {}]
  %s4 = inlined_call_operand.vmem [shape: f32[1,32], index: 4, kind: input, shape index: {}]
  %s5 = inlined_call_operand.hbm [shape: f32[16,32], index: 5, kind: output, shape index: {}]
  %s6 = sld [smem:[#allocation0]]
  $region61: #{tpu_custom_call.1} parent=0
    _
  %s8 = ssub.s32 1, %s6
  %s9 = scalar_select 0, %s8, %s6
  $region1: #{tpu_custom_call.1} parent=0
    #allocation3 [shape = 'u8[8192]{0}', space=vmem, size = 0x2000, scoped, tag = 'output window, operand 0']
    #allocation4 [shape = 's32[2]{0}', space=sflag, size = 0x8, scoped, tag = 'scoped memory for tpu_custom_call.1']
    %10 = vsyncpa [#allocation4], 0
    %s11 = scalar_lea.sflag [#allocation4], 1
    %12 = vsyncpa %s11, 0
    loop: start=0, step=1, limit=4
    $region2: #{tpu_custom_call.1} parent=1 // loop_pre_header
      _
    $region3: #{tpu_custom_call.1} parent=1 // loop_header
      %s14 = sphi 0, %s18
      %p15 = scmp.ge.s32.totalorder %s14, 4
      %s21 = sphi 0, %s33
      %s22 = sphi 0, %s29
      %s23 = sphi 0, %s21
      %s24 = sphi 0, %s22
      %s25 = sphi 0, %s23
      %s26 = sphi 0, %s24
      %s36 = sphi 0, %s38
      %s39 = sphi 0, %s36
      %s40 = sphi 0, %s39
      %s56 = sphi 0, %s40
      %s62 = sphi 0, %s64
      %s65 = sphi 0, %s62
      %s66 = sphi 0, %s65
      %s82 = sphi 0, %s66
      %s86 = sphi 0, %s86
      %s88 = sphi 0, %s86
      %s89 = sphi 0, %s88
      %s103 = sphi 0, %s89
      %s109 = sphi 0, %s111
      %s112 = sphi 0, %s109
      %s113 = sphi 0, %s112
      %s129 = sphi 0, %s113
      %s133 = sphi 0, %s133
      %s135 = sphi 0, %s133
      %s136 = sphi 0, %s135
      %s150 = sphi 0, %s136
      %s156 = sphi 0, %s158
      %s159 = sphi 0, %s156
      %s160 = sphi 0, %s159
      %s176 = sphi 0, %s160
    $region4: #{tpu_custom_call.1} parent=1 // loop_header_branch
      %17 = sbr.rel (%p15) target = $region8
    $region5: #{tpu_custom_call.1} parent=1 // loop_body
      %s19 = ssub.s32 %s14, 1
      %s20 = ssub.s32 %s14, 2
      %s27 = sadd.s32 1, %s22
      %p28 = scmp.ge.s32.totalorder %s27, 1
      %s29 = scalar_select %p28, 0, %s27
      %s30 = sadd.s32 1, %s21
      %s31 = scalar_select %p28, %s30, %s21
      %p32 = scmp.ge.s32.totalorder %s31, 2
      %s33 = scalar_select %p32, 0, %s31
      %s34 = ssub.s32 %s21, %s33
      %p35 = scmp.eq.s32.totalorder %s34, 0
      %s37 = sadd.s32 %s36, 1
      %s38 = scalar_select %p35, %s36, %s37
      %p41 = pneg %p35
      %p42 = scmp.eq.s32.totalorder %s14, 1
      %p43 = por %p41, %p42
      %p44 = scmp.ne.s32.totalorder %s36, %s39
      %p45 = scmp.eq.s32.totalorder %s14, 0
      %p46 = por %p44, %p45
      %p47 = scmp.ne.s32.totalorder %s36, %s39
      %p48 = scmp.eq.s32.totalorder %s19, 1
      %p49 = por %p47, %p48
      %p50 = scmp.ne.s32.totalorder %s39, %s40
      %p51 = scmp.eq.s32.totalorder %s19, 0
      %p52 = por %p50, %p51
      %p53 = scmp.ne.s32.totalorder %s39, %s40
      %p54 = scmp.eq.s32.totalorder %s20, 1
      %p55 = por %p53, %p54
      %p57 = scmp.ne.s32.totalorder %s40, %s56
      %p58 = scmp.eq.s32.totalorder %s20, 0
      %p59 = por %p57, %p58
      %s60 = ssub.s32 %s22, %s29
      %p61 = scmp.eq.s32.totalorder %s60, 0
      %s63 = sadd.s32 %s62, 1
      %s64 = scalar_select %p61, %s62, %s63
      %p67 = pneg %p61
      %p68 = scmp.eq.s32.totalorder %s14, 1
      %p69 = por %p67, %p68
      %p70 = scmp.ne.s32.totalorder %s62, %s65
      %p71 = scmp.eq.s32.totalorder %s14, 0
      %p72 = por %p70, %p71
      %p73 = scmp.ne.s32.totalorder %s62, %s65
      %p74 = scmp.eq.s32.totalorder %s19, 1
      %p75 = por %p73, %p74
      %p76 = scmp.ne.s32.totalorder %s65, %s66
      %p77 = scmp.eq.s32.totalorder %s19, 0
      %p78 = por %p76, %p77
      %p79 = scmp.ne.s32.totalorder %s65, %s66
      %p80 = scmp.eq.s32.totalorder %s20, 1
      %p81 = por %p79, %p80
      %p83 = scmp.ne.s32.totalorder %s66, %s82
      %p84 = scmp.eq.s32.totalorder %s20, 0
      %p85 = por %p83, %p84
      %s87 = sadd.s32 %s86, 1
      %p90 = scmp.eq.s32.totalorder %s14, 1
      %p91 = scmp.ne.s32.totalorder %s86, %s88
      %p92 = scmp.eq.s32.totalorder %s14, 0
      %p93 = por %p91, %p92
      %p94 = scmp.ne.s32.totalorder %s86, %s88
      %p95 = scmp.eq.s32.totalorder %s19, 1
      %p96 = por %p94, %p95
      %p97 = scmp.ne.s32.totalorder %s88, %s89
      %p98 = scmp.eq.s32.totalorder %s19, 0
      %p99 = por %p97, %p98
      %p100 = scmp.ne.s32.totalorder %s88, %s89
      %p101 = scmp.eq.s32.totalorder %s20, 1
      %p102 = por %p100, %p101
      %p104 = scmp.ne.s32.totalorder %s89, %s103
      %p105 = scmp.eq.s32.totalorder %s20, 0
      %p106 = por %p104, %p105
      %s107 = ssub.s32 %s22, %s29
      %p108 = scmp.eq.s32.totalorder %s107, 0
      %s110 = sadd.s32 %s109, 1
      %s111 = scalar_select %p108, %s109, %s110
      %p114 = pneg %p108
      %p115 = scmp.eq.s32.totalorder %s14, 1
      %p116 = por %p114, %p115
      %p117 = scmp.ne.s32.totalorder %s109, %s112
      %p118 = scmp.eq.s32.totalorder %s14, 0
      %p119 = por %p117, %p118
      %p120 = scmp.ne.s32.totalorder %s109, %s112
      %p121 = scmp.eq.s32.totalorder %s19, 1
      %p122 = por %p120, %p121
      %p123 = scmp.ne.s32.totalorder %s112, %s113
      %p124 = scmp.eq.s32.totalorder %s19, 0
      %p125 = por %p123, %p124
      %p126 = scmp.ne.s32.totalorder %s112, %s113
      %p127 = scmp.eq.s32.totalorder %s20, 1
      %p128 = por %p126, %p127
      %p130 = scmp.ne.s32.totalorder %s113, %s129
      %p131 = scmp.eq.s32.totalorder %s20, 0
      %p132 = por %p130, %p131
      %s134 = sadd.s32 %s133, 1
      %p137 = scmp.eq.s32.totalorder %s14, 1
      %p138 = scmp.ne.s32.totalorder %s133, %s135
      %p139 = scmp.eq.s32.totalorder %s14, 0
      %p140 = por %p138, %p139
      %p141 = scmp.ne.s32.totalorder %s133, %s135
      %p142 = scmp.eq.s32.totalorder %s19, 1
      %p143 = por %p141, %p142
      %p144 = scmp.ne.s32.totalorder %s135, %s136
      %p145 = scmp.eq.s32.totalorder %s19, 0
      %p146 = por %p144, %p145
      %p147 = scmp.ne.s32.totalorder %s135, %s136
      %p148 = scmp.eq.s32.totalorder %s20, 1
      %p149 = por %p147, %p148
      %p151 = scmp.ne.s32.totalorder %s136, %s150
      %p152 = scmp.eq.s32.totalorder %s20, 0
      %p153 = por %p151, %p152
      %s154 = ssub.s32 %s21, %s33
      %p155 = scmp.eq.s32.totalorder %s154, 0
      %s157 = sadd.s32 %s156, 1
      %s158 = scalar_select %p155, %s156, %s157
      %p161 = pneg %p155
      %p162 = scmp.eq.s32.totalorder %s14, 1
      %p163 = por %p161, %p162
      %p164 = scmp.ne.s32.totalorder %s156, %s159
      %p165 = scmp.eq.s32.totalorder %s14, 0
      %p166 = por %p164, %p165
      %p167 = scmp.ne.s32.totalorder %s156, %s159
      %p168 = scmp.eq.s32.totalorder %s19, 1
      %p169 = por %p167, %p168
      %p170 = scmp.ne.s32.totalorder %s159, %s160
      %p171 = scmp.eq.s32.totalorder %s19, 0
      %p172 = por %p170, %p171
      %p173 = scmp.ne.s32.totalorder %s159, %s160
      %p174 = scmp.eq.s32.totalorder %s20, 1
      %p175 = por %p173, %p174
      %p177 = scmp.ne.s32.totalorder %s160, %s176
      %p178 = scmp.eq.s32.totalorder %s20, 0
      %p179 = por %p177, %p178
      %p180 = scmp.le.s32.totalorder 1, %s14
      %p181 = scmp.lt.s32.totalorder %s14, 3
      %p182 = pnand %p180, %p181
      %p183 = pneg %p182
      // Predicated region
      $region9: #{tpu_custom_call.1} parent=5 // pred_check
        _
      $region10: #{tpu_custom_call.1} parent=5 // pred_check_branch
        %185 = sbr.rel (%p182) target = $region12
      $region11: #{tpu_custom_call.1} parent=5 // pred_region
        %s186 = ssub.s32 %s14, 1
        // Predicated region
        $region13: #{tpu_custom_call.1} parent=11 // pred_check
          %p187 = pneg %p78
        $region14: #{tpu_custom_call.1} parent=11 // pred_check_branch
          %189 = sbr.rel (%p187) target = $region16
        $region15: #{tpu_custom_call.1} parent=11 // pred_region
          %p190 = scmp.lt.s32.totalorder %s24, 0
          %s191 = scalar_select %p190, %s24, 0
          %s192 = smul.addr %s191, 8
          %s193 = scalar_lea.vmem %s1, %s192
        $region16: #{tpu_custom_call.1} parent=11 // pred_fallthru
          _
        // Predicated region
        $region17: #{tpu_custom_call.1} parent=11 // pred_check
          %p194 = pneg %p99
        $region18: #{tpu_custom_call.1} parent=11 // pred_check_branch
          %196 = sbr.rel (%p194) target = $region20
        $region19: #{tpu_custom_call.1} parent=11 // pred_region
          _
        $region20: #{tpu_custom_call.1} parent=11 // pred_fallthru
          _
        // Predicated region
        $region21: #{tpu_custom_call.1} parent=11 // pred_check
          %p197 = pneg %p125
        $region22: #{tpu_custom_call.1} parent=11 // pred_check_branch
          %199 = sbr.rel (%p197) target = $region24
        $region23: #{tpu_custom_call.1} parent=11 // pred_region
          %s200 = smul.u32 8, %s24
          %p201 = scmp.lt.s32.totalorder %s200, 7
          %s202 = scalar_select %p201, %s200, 7
          %s203 = smul.addr %s202, 8
          %s204 = scalar_lea.vmem %s3, %s203
          %s205 = smul.u32 8, %s24
        $region24: #{tpu_custom_call.1} parent=11 // pred_fallthru
          _
        // Predicated region
        $region25: #{tpu_custom_call.1} parent=11 // pred_check
          %p206 = pneg %p146
        $region26: #{tpu_custom_call.1} parent=11 // pred_check_branch
          %208 = sbr.rel (%p206) target = $region28
        $region27: #{tpu_custom_call.1} parent=11 // pred_region
          _
        $region28: #{tpu_custom_call.1} parent=11 // pred_fallthru
          _
      $region12: #{tpu_custom_call.1} parent=5 // pred_fallthru
        _
      %p209 = scmp.lt.s32.totalorder %s14, 2
      // Predicated region
      $region29: #{tpu_custom_call.1} parent=5 // pred_check
        %p210 = pneg %p209
      $region30: #{tpu_custom_call.1} parent=5 // pred_check_branch
        %212 = sbr.rel (%p210) target = $region32
      $region31: #{tpu_custom_call.1} parent=5 // pred_region
        // Predicated region
        $region33: #{tpu_custom_call.1} parent=31 // pred_check
          %p213 = pneg %p46
        $region34: #{tpu_custom_call.1} parent=31 // pred_check_branch
          %215 = sbr.rel (%p213) target = $region36
        $region35: #{tpu_custom_call.1} parent=31 // pred_region
          %p216 = scmp.lt.s32.totalorder %s21, 1
          %s217 = scalar_select %p216, %s21, 1
          %s218 = smul.addr %s217, 8
          %s219 = scalar_lea.vmem %s0, %s218
        $region36: #{tpu_custom_call.1} parent=31 // pred_fallthru
          _
      $region32: #{tpu_custom_call.1} parent=5 // pred_fallthru
        _
      %p220 = scmp.le.s32.totalorder 1, %s14
      %p221 = scmp.lt.s32.totalorder %s14, 3
      %p222 = pnand %p220, %p221
      %p223 = pneg %p222
      // Predicated region
      $region37: #{tpu_custom_call.1} parent=5 // pred_check
        _
      $region38: #{tpu_custom_call.1} parent=5 // pred_check_branch
        %225 = sbr.rel (%p222) target = $region40
      $region39: #{tpu_custom_call.1} parent=5 // pred_region
        %s226 = ssub.s32 %s14, 1
        %p227 = scmp.lt.s32.totalorder %s23, 1
        %s228 = scalar_select %p227, %s23, 1
        %s229 = smul.addr %s228, 8
        %s230 = scalar_lea.vmem %s0, %s229
        %p231 = pneg %p52
        %p232 = pneg %p49
        %p233 = scmp.lt.s32.totalorder %s24, 0
        %s234 = scalar_select %p233, %s24, 0
        %s235 = smul.addr %s234, 8
        %s236 = scalar_lea.vmem %s1, %s235
        %p237 = pneg %p78
        %p238 = pneg %p75
        %p239 = pneg %p99
        %p240 = pneg %p96
        %s241 = smul.u32 8, %s24
        %p242 = scmp.lt.s32.totalorder %s241, 7
        %s243 = scalar_select %p242, %s241, 7
        %s244 = smul.addr %s243, 8
        %s245 = scalar_lea.vmem %s3, %s244
        %p246 = pneg %p125
        %p247 = pneg %p122
        %p248 = pneg %p146
        %p249 = pneg %p143
        %p250 = pneg %p172
        %p251 = pneg %p169
        %s252 = sand.u32 %s159, 1
        %s253 = scalar_lea.sflag [#allocation4], %s252
        %s254 = sand.u32 %s159, 1
        %s255 = smul.addr %s254, 8
        %s256 = scalar_lea.vmem [#allocation3], %s255
        %p257 = scmp.lt.s32.totalorder %s23, 1
        %s258 = scalar_select %p257, %s23, 1
        %s259 = smul.addr %s258, 8
        %s260 = scalar_lea.vmem %s0, %s259
        %p261 = scmp.lt.s32.totalorder %s24, 0
        %s262 = scalar_select %p261, %s24, 0
        %s263 = smul.addr %s262, 8
        %s264 = scalar_lea.vmem %s1, %s263
        %s265 = smul.u32 8, %s24
        %p266 = scmp.lt.s32.totalorder %s265, 7
        %s267 = scalar_select %p266, %s265, 7
        %s268 = smul.addr %s267, 8
        %s269 = scalar_lea.vmem %s3, %s268
        %s270 = smul.u32 8, %s24
        %p271 = scmp.eq.s32.totalorder %s24, 0
        // Predicated region
        $region41: #{tpu_custom_call.1} parent=39 // pred_check
          %p272 = pneg %p271
        $region42: #{tpu_custom_call.1} parent=39 // pred_check_branch
          %274 = sbr.rel (%p272) target = $region44
        $region43: #{tpu_custom_call.1} parent=39 // pred_region
          %v275 = vld [vmem:[%s4] sm:$0x1]
          %v277 = vlaneseq
          %v278 = vshrl.u32 %v277, 7
          %v279 = vsub.s32 0, %v278
          %v280 = vrot.slane %v275, %v279
          %vm282 = vcmask 261120
          %283 = vst.msk [vmem:[#allocation2] sm:$0xff] %vm282, %v280
        $region44: #{tpu_custom_call.1} parent=39 // pred_fallthru
          _
        %v284 = vld [vmem:[%s260] sm:$0xff]
        %v285 = vld [vmem:[%s264] sm:$0xff]
        %v286 = vld [vmem:[%s264 + $0x8] sm:$0xff]
        %v287 = vld [vmem:[%s264 + $0x10] sm:$0xff]
        %v288 = vld [vmem:[%s264 + $0x18] sm:$0xff]
        %v289 = vld [vmem:[%s2] sm:$0x1]
        %v291 = vlaneseq
        %v292 = vshrl.u32 %v291, 7
        %v293 = vsub.s32 0, %v292
        %v294 = vrot.slane %v289, %v293
        %vm296 = vcmask 261120
        %v298 = vsel %vm296, %v284, 0
        %300 = vmatprep.subr.mxu0 0.0
        %301 = vmatpush1.msra.mxu0 %v285
        %302 = vmatprep.subr.mxu0 0.0
        %303 = vmatpush1.msra.mxu0 %v286
        %304 = vmatprep.subr.mxu0 0.0
        %305 = vmatpush1.msra.mxu0 %v287
        %306 = vmatprep.subr.mxu0 0.0
        %307 = vmatpush1.msra.mxu0 %v288
        %308 = vmatprep.subr.mxu0 0.0
        %309 = vmatpush1.msra.mxu0 0.0
        %310 = vmatprep.subr.mxu0 0.0
        %311 = vmatpush1.msra.mxu0 0.0
        %312 = vmatprep.subr.mxu0 0.0
        %313 = vmatpush1.msra.mxu0 0.0
        %314 = vmatprep.subr.mxu0 0.0
        %315 = vmatpush1.msra.mxu0 0.0
        %316 = vmatprep.subr.mxu0 0.0
        %317 = vmatpush1.msra.mxu0 0.0
        %318 = vmatprep.subr.mxu0 0.0
        %319 = vmatpush1.msra.mxu0 0.0
        %320 = vmatprep.subr.mxu0 0.0
        %321 = vmatpush1.msra.mxu0 0.0
        %322 = vmatprep.subr.mxu0 0.0
        %323 = vmatpush1.msra.mxu0 0.0
        %324 = vmatprep.subr.mxu0 0.0
        %325 = vmatpush1.msra.mxu0 0.0
        %326 = vmatprep.subr.mxu0 0.0
        %327 = vmatpush1.msra.mxu0 0.0
        %328 = vmatprep.subr.mxu0 0.0
        %329 = vmatpush1.msra.mxu0 0.0
        %330 = vmatprep.subr.mxu0 0.0
        %331 = vmatpush1.msra.mxu0 0.0
        %332 = vmatprep.subr.mxu0 0.0
        %333 = vmatpush1.msra.mxu0 0.0
        %334 = vmatprep.subr.mxu0 0.0
        %335 = vmatpush1.msra.mxu0 0.0
        %336 = vmatprep.subr.mxu0 0.0
        %337 = vmatpush1.msra.mxu0 0.0
        %338 = vmatprep.subr.mxu0 0.0
        %339 = vmatpush1.msra.mxu0 0.0
        %340 = vmatprep.subr.mxu0 0.0
        %341 = vmatpush1.msra.mxu0 0.0
        %342 = vmatprep.subr.mxu0 0.0
        %343 = vmatpush1.msra.mxu0 0.0
        %344 = vmatprep.subr.mxu0 0.0
        %345 = vmatpush1.msra.mxu0 0.0
        %346 = vmatprep.subr.mxu0 0.0
        %347 = vmatpush1.msra.mxu0 0.0
        %348 = vmatprep.subr.mxu0 0.0
        %349 = vmatpush1.msra.mxu0 0.0
        %350 = vmatprep.subr.mxu0 0.0
        %351 = vmatpush1.msra.mxu0 0.0
        %352 = vmatprep.subr.mxu0 0.0
        %353 = vmatpush1.msra.mxu0 0.0
        %354 = vmatprep.subr.mxu0 0.0
        %355 = vmatpush1.msra.mxu0 0.0
        %356 = vmatprep.subr.mxu0 0.0
        %357 = vmatpush1.msra.mxu0 0.0
        %358 = vmatprep.subr.mxu0 0.0
        %359 = vmatpush1.msra.mxu0 0.0
        %360 = vmatprep.subr.mxu0 0.0
        %361 = vmatpush1.msra.mxu0 0.0
        %362 = vmatprep.subr.mxu0 0.0
        %363 = vmatpush1.msra.mxu0 0.0
        %364 = vmatprep.mubr.f32.mxu0 0.0
        %365 = vmatmul.mubr.f32.gmra.mrb[0].mxu0 %v298
        %v366 = vpop.f32.mrb[0].mxu0
        %v367 = vadd.f32 %v294, %v366
        %v368 = vpop.f32.mrb[0].mxu0
        %369 = vdwg.mxu0
        %v370 = vmul.f32 %v367, 0.5
        %v371 = vmul.f32 %v367, 0.70710677
        %v372 = verf.f32.pop %v371
        %v373 = vadd.f32 %v372, 1.0
        %v374 = vmul.f32 %v370, %v373
        %v375 = vld [vmem:[#allocation2] sm:$0xff]
        %v376 = vld [vmem:[%s269] sm:$0xff]
        %v377 = vld [vmem:[%s269 + $0x8] sm:$0xff]
        %v378 = vld [vmem:[%s269 + $0x10] sm:$0xff]
        %v379 = vld [vmem:[%s269 + $0x18] sm:$0xff]
        %v380 = vld [vmem:[%s269 + $0x20] sm:$0xff]
        %v381 = vld [vmem:[%s269 + $0x28] sm:$0xff]
        %v382 = vld [vmem:[%s269 + $0x30] sm:$0xff]
        %v383 = vld [vmem:[%s269 + $0x38] sm:$0xff]
        %vm384 = vcmask 523264
        %v386 = vsel %vm384, %v374, 0
        %388 = vmatprep.subr.mxu0 0.0
        %389 = vmatpush1.msra.mxu0 %v376
        %390 = vmatprep.subr.mxu0 0.0
        %391 = vmatpush1.msra.mxu0 %v377
        %392 = vmatprep.subr.mxu0 0.0
        %393 = vmatpush1.msra.mxu0 %v378
        %394 = vmatprep.subr.mxu0 0.0
        %395 = vmatpush1.msra.mxu0 %v379
        %396 = vmatprep.subr.mxu0 0.0
        %397 = vmatpush1.msra.mxu0 %v380
        %398 = vmatprep.subr.mxu0 0.0
        %399 = vmatpush1.msra.mxu0 %v381
        %400 = vmatprep.subr.mxu0 0.0
        %401 = vmatpush1.msra.mxu0 %v382
        %402 = vmatprep.subr.mxu0 0.0
        %403 = vmatpush1.msra.mxu0 %v383
        %404 = vmatprep.subr.mxu0 0.0
        %405 = vmatpush1.msra.mxu0 0.0
        %406 = vmatprep.subr.mxu0 0.0
        %407 = vmatpush1.msra.mxu0 0.0
        %408 = vmatprep.subr.mxu0 0.0
        %409 = vmatpush1.msra.mxu0 0.0
        %410 = vmatprep.subr.mxu0 0.0
        %411 = vmatpush1.msra.mxu0 0.0
        %412 = vmatprep.subr.mxu0 0.0
        %413 = vmatpush1.msra.mxu0 0.0
        %414 = vmatprep.subr.mxu0 0.0
        %415 = vmatpush1.msra.mxu0 0.0
        %416 = vmatprep.subr.mxu0 0.0
        %417 = vmatpush1.msra.mxu0 0.0
        %418 = vmatprep.subr.mxu0 0.0
        %419 = vmatpush1.msra.mxu0 0.0
        %420 = vmatprep.subr.mxu0 0.0
        %421 = vmatpush1.msra.mxu0 0.0
        %422 = vmatprep.subr.mxu0 0.0
        %423 = vmatpush1.msra.mxu0 0.0
        %424 = vmatprep.subr.mxu0 0.0
        %425 = vmatpush1.msra.mxu0 0.0
        %426 = vmatprep.subr.mxu0 0.0
        %427 = vmatpush1.msra.mxu0 0.0
        %428 = vmatprep.subr.mxu0 0.0
        %429 = vmatpush1.msra.mxu0 0.0
        %430 = vmatprep.subr.mxu0 0.0
        %431 = vmatpush1.msra.mxu0 0.0
        %432 = vmatprep.subr.mxu0 0.0
        %433 = vmatpush1.msra.mxu0 0.0
        %434 = vmatprep.subr.mxu0 0.0
        %435 = vmatpush1.msra.mxu0 0.0
        %436 = vmatprep.subr.mxu0 0.0
        %437 = vmatpush1.msra.mxu0 0.0
        %438 = vmatprep.subr.mxu0 0.0
        %439 = vmatpush1.msra.mxu0 0.0
        %440 = vmatprep.subr.mxu0 0.0
        %441 = vmatpush1.msra.mxu0 0.0
        %442 = vmatprep.subr.mxu0 0.0
        %443 = vmatpush1.msra.mxu0 0.0
        %444 = vmatprep.subr.mxu0 0.0
        %445 = vmatpush1.msra.mxu0 0.0
        %446 = vmatprep.subr.mxu0 0.0
        %447 = vmatpush1.msra.mxu0 0.0
        %448 = vmatprep.subr.mxu0 0.0
        %449 = vmatpush1.msra.mxu0 0.0
        %450 = vmatprep.subr.mxu0 0.0
        %451 = vmatpush1.msra.mxu0 0.0
        %452 = vmatprep.mubr.f32.mxu0 0.0
        %453 = vmatmul.mubr.f32.gmra.mrb[0].mxu0 %v386
        %v454 = vpop.f32.mrb[0].mxu0
        %v455 = vadd.f32 0.0, %v454
        %v456 = vpop.f32.mrb[0].mxu0
        %457 = vdwg.mxu0
        %v458 = vadd.f32 %v375, %v455
        %459 = vst.msk [vmem:[#allocation2] sm:$0xff] %vm296, %v458
        // Predicated region
        $region45: #{tpu_custom_call.1} parent=39 // pred_check
          %p460 = pneg %p271
        $region46: #{tpu_custom_call.1} parent=39 // pred_check_branch
          %462 = sbr.rel (%p460) target = $region48
        $region47: #{tpu_custom_call.1} parent=39 // pred_region
          %v463 = vld [vmem:[#allocation2] sm:$0xff]
          %464 = vst.msk [vmem:[%s256] sm:$0xff] %vm296, %v463
        $region48: #{tpu_custom_call.1} parent=39 // pred_fallthru
          _
        %s465 = sand.u32 %s159, 1
        %s466 = scalar_lea.sflag [#allocation4], %s465
        %s467 = sand.u32 %s159, 1
        %s468 = smul.addr %s467, 8
        %s469 = scalar_lea.vmem [#allocation3], %s468
        // Predicated region
        $region49: #{tpu_custom_call.1} parent=39 // pred_check
          %p470 = pneg %p169
        $region50: #{tpu_custom_call.1} parent=39 // pred_check_branch
          %472 = sbr.rel (%p470) target = $region52
        $region51: #{tpu_custom_call.1} parent=39 // pred_region
          %s474 = ssub.s32 128, 128
          %475 = vsyncadd %s466, %s474
          %s476 = smul.addr %s23, 128
          %s477 = scalar_lea.hbm %s5, %s476
          %s479 = sshll.u32 %s469, 4
          %s480 = int_to_ptr.vmem [resolvable:$true] %s479
          %482 = dma.vmem_to_hbm [thread:$0]  %s480, 128, %s477, %s466
        $region52: #{tpu_custom_call.1} parent=39 // pred_fallthru
          _
      $region40: #{tpu_custom_call.1} parent=5 // pred_fallthru
        _
      %p483 = scmp.le.s32.totalorder 2, %s14
      // Predicated region
      $region53: #{tpu_custom_call.1} parent=5 // pred_check
        %p484 = pneg %p483
      $region54: #{tpu_custom_call.1} parent=5 // pred_check_branch
        %486 = sbr.rel (%p484) target = $region56
      $region55: #{tpu_custom_call.1} parent=5 // pred_region
        %s487 = ssub.s32 %s14, 2
        // Predicated region
        $region57: #{tpu_custom_call.1} parent=55 // pred_check
          %p488 = pneg %p175
        $region58: #{tpu_custom_call.1} parent=55 // pred_check_branch
          %490 = sbr.rel (%p488) target = $region60
        $region59: #{tpu_custom_call.1} parent=55 // pred_region
          %s491 = sand.u32 %s160, 1
          %s492 = scalar_lea.sflag [#allocation4], %s491
          %s493 = sand.u32 %s160, 1
          %s494 = smul.addr %s493, 8
          %s495 = scalar_lea.vmem [#allocation3], %s494
          %496 = dma.done %s492, 128
        $region60: #{tpu_custom_call.1} parent=55 // pred_fallthru
          _
      $region56: #{tpu_custom_call.1} parent=5 // pred_fallthru
        _
    $region6: #{tpu_custom_call.1} parent=1 // loop_footer
      %s18 = sadd.s32 1, %s14
    $region7: #{tpu_custom_call.1} parent=1 // loop_footer_branch
      %13 = sbr.rel target = $region3
    $region8: #{tpu_custom_call.1} parent=1 // loop_exit
      _
    %497 = vsyncpa [#allocation4], 1
    %s498 = scalar_lea.sflag [#allocation4], 1
    %499 = vsyncpa %s498, 1

// kernel: tpu_custom_call.1
$region0: #{tpu_custom_call.1}
  #allocation0 [shape = 'u32[]', space=smem, size = 0x4, offset = 0x4, fixed_abs, tag = 'smem constant byte address 0x4 - core index']
  #allocation1 [shape = 'u32[144,128]{1,0:T(1,128)}', space=vmem, size = 0x12000, scoped, tag = 'internal scratch']
  #allocation2 [shape = 'f32[8,32]{1,0:T(8,128)}', space=vmem, size = 0x1000, scoped, tag = 'scratch operand']
  %s0 = inlined_call_operand.vmem [shape: f32[16,32], index: 0, kind: input, shape index: {}]
  %s1 = inlined_call_operand.vmem [shape: f32[32,64], index: 1, kind: input, shape index: {}]
  %s2 = inlined_call_operand.vmem [shape: f32[1,64], index: 2, kind: input, shape index: {}]
  %s3 = inlined_call_operand.vmem [shape: f32[64,32], index: 3, kind: input, shape index: {}]
  %s4 = inlined_call_operand.vmem [shape: f32[1,32], index: 4, kind: input, shape index: {}]
  %s5 = inlined_call_operand.hbm [shape: f32[16,32], index: 5, kind: output, shape index: {}]
  %s6 = sld [smem:[#allocation0]]
  $region61: #{tpu_custom_call.1} parent=0
    _
  %s8 = ssub.s32 1, %s6
  %s9 = scalar_select 0, %s8, %s6
  $region1: #{tpu_custom_call.1} parent=0
    #allocation3 [shape = 'u8[8192]{0}', space=vmem, size = 0x2000, scoped, tag = 'output window, operand 0']
    #allocation4 [shape = 's32[2]{0}', space=sflag, size = 0x8, scoped, tag = 'scoped memory for tpu_custom_call.1']
    %10 = vsyncpa [#allocation4], 0
    %s11 = scalar_lea.sflag [#allocation4], 1
    %12 = vsyncpa %s11, 0
    loop: start=0, step=1, limit=4
    $region2: #{tpu_custom_call.1} parent=1 // loop_pre_header
      _
    $region3: #{tpu_custom_call.1} parent=1 // loop_header
      %s14 = sphi 0, %s18
      %p15 = scmp.ge.s32.totalorder %s14, 4
      %s21 = sphi 0, %s33
      %s22 = sphi 0, %s29
      %s23 = sphi 0, %s21
      %s24 = sphi 0, %s22
      %s25 = sphi 0, %s23
      %s26 = sphi 0, %s24
      %s36 = sphi 0, %s38
      %s39 = sphi 0, %s36
      %s40 = sphi 0, %s39
      %s56 = sphi 0, %s40
      %s62 = sphi 0, %s64
      %s65 = sphi 0, %s62
      %s66 = sphi 0, %s65
      %s82 = sphi 0, %s66
      %s86 = sphi 0, %s86
      %s88 = sphi 0, %s86
      %s89 = sphi 0, %s88
      %s103 = sphi 0, %s89
      %s109 = sphi 0, %s111
      %s112 = sphi 0, %s109
      %s113 = sphi 0, %s112
      %s129 = sphi 0, %s113
      %s133 = sphi 0, %s133
      %s135 = sphi 0, %s133
      %s136 = sphi 0, %s135
      %s150 = sphi 0, %s136
      %s156 = sphi 0, %s158
      %s159 = sphi 0, %s156
      %s160 = sphi 0, %s159
      %s176 = sphi 0, %s160
    $region4: #{tpu_custom_call.1} parent=1 // loop_header_branch
      %17 = sbr.rel (%p15) target = $region8
    $region5: #{tpu_custom_call.1} parent=1 // loop_body
      %s19 = ssub.s32 %s14, 1
      %s20 = ssub.s32 %s14, 2
      %s27 = sadd.s32 1, %s22
      %p28 = scmp.ge.s32.totalorder %s27, 1
      %s29 = scalar_select %p28, 0, %s27
      %s30 = sadd.s32 1, %s21
      %s31 = scalar_select %p28, %s30, %s21
      %p32 = scmp.ge.s32.totalorder %s31, 2
      %s33 = scalar_select %p32, 0, %s31
      %s34 = ssub.s32 %s21, %s33
      %p35 = scmp.eq.s32.totalorder %s34, 0
      %s37 = sadd.s32 %s36, 1
      %s38 = scalar_select %p35, %s36, %s37
      %p41 = pneg %p35
      %p42 = scmp.eq.s32.totalorder %s14, 1
      %p43 = por %p41, %p42
      %p44 = scmp.ne.s32.totalorder %s36, %s39
      %p45 = scmp.eq.s32.totalorder %s14, 0
      %p46 = por %p44, %p45
      %p47 = scmp.ne.s32.totalorder %s36, %s39
      %p48 = scmp.eq.s32.totalorder %s19, 1
      %p49 = por %p47, %p48
      %p50 = scmp.ne.s32.totalorder %s39, %s40
      %p51 = scmp.eq.s32.totalorder %s19, 0
      %p52 = por %p50, %p51
      %p53 = scmp.ne.s32.totalorder %s39, %s40
      %p54 = scmp.eq.s32.totalorder %s20, 1
      %p55 = por %p53, %p54
      %p57 = scmp.ne.s32.totalorder %s40, %s56
      %p58 = scmp.eq.s32.totalorder %s20, 0
      %p59 = por %p57, %p58
      %s60 = ssub.s32 %s22, %s29
      %p61 = scmp.eq.s32.totalorder %s60, 0
      %s63 = sadd.s32 %s62, 1
      %s64 = scalar_select %p61, %s62, %s63
      %p67 = pneg %p61
      %p68 = scmp.eq.s32.totalorder %s14, 1
      %p69 = por %p67, %p68
      %p70 = scmp.ne.s32.totalorder %s62, %s65
      %p71 = scmp.eq.s32.totalorder %s14, 0
      %p72 = por %p70, %p71
      %p73 = scmp.ne.s32.totalorder %s62, %s65
      %p74 = scmp.eq.s32.totalorder %s19, 1
      %p75 = por %p73, %p74
      %p76 = scmp.ne.s32.totalorder %s65, %s66
      %p77 = scmp.eq.s32.totalorder %s19, 0
      %p78 = por %p76, %p77
      %p79 = scmp.ne.s32.totalorder %s65, %s66
      %p80 = scmp.eq.s32.totalorder %s20, 1
      %p81 = por %p79, %p80
      %p83 = scmp.ne.s32.totalorder %s66, %s82
      %p84 = scmp.eq.s32.totalorder %s20, 0
      %p85 = por %p83, %p84
      %s87 = sadd.s32 %s86, 1
      %p90 = scmp.eq.s32.totalorder %s14, 1
      %p91 = scmp.ne.s32.totalorder %s86, %s88
      %p92 = scmp.eq.s32.totalorder %s14, 0
      %p93 = por %p91, %p92
      %p94 = scmp.ne.s32.totalorder %s86, %s88
      %p95 = scmp.eq.s32.totalorder %s19, 1
      %p96 = por %p94, %p95
      %p97 = scmp.ne.s32.totalorder %s88, %s89
      %p98 = scmp.eq.s32.totalorder %s19, 0
      %p99 = por %p97, %p98
      %p100 = scmp.ne.s32.totalorder %s88, %s89
      %p101 = scmp.eq.s32.totalorder %s20, 1
      %p102 = por %p100, %p101
      %p104 = scmp.ne.s32.totalorder %s89, %s103
      %p105 = scmp.eq.s32.totalorder %s20, 0
      %p106 = por %p104, %p105
      %s107 = ssub.s32 %s22, %s29
      %p108 = scmp.eq.s32.totalorder %s107, 0
      %s110 = sadd.s32 %s109, 1
      %s111 = scalar_select %p108, %s109, %s110
      %p114 = pneg %p108
      %p115 = scmp.eq.s32.totalorder %s14, 1
      %p116 = por %p114, %p115
      %p117 = scmp.ne.s32.totalorder %s109, %s112
      %p118 = scmp.eq.s32.totalorder %s14, 0
      %p119 = por %p117, %p118
      %p120 = scmp.ne.s32.totalorder %s109, %s112
      %p121 = scmp.eq.s32.totalorder %s19, 1
      %p122 = por %p120, %p121
      %p123 = scmp.ne.s32.totalorder %s112, %s113
      %p124 = scmp.eq.s32.totalorder %s19, 0
      %p125 = por %p123, %p124
      %p126 = scmp.ne.s32.totalorder %s112, %s113
      %p127 = scmp.eq.s32.totalorder %s20, 1
      %p128 = por %p126, %p127
      %p130 = scmp.ne.s32.totalorder %s113, %s129
      %p131 = scmp.eq.s32.totalorder %s20, 0
      %p132 = por %p130, %p131
      %s134 = sadd.s32 %s133, 1
      %p137 = scmp.eq.s32.totalorder %s14, 1
      %p138 = scmp.ne.s32.totalorder %s133, %s135
      %p139 = scmp.eq.s32.totalorder %s14, 0
      %p140 = por %p138, %p139
      %p141 = scmp.ne.s32.totalorder %s133, %s135
      %p142 = scmp.eq.s32.totalorder %s19, 1
      %p143 = por %p141, %p142
      %p144 = scmp.ne.s32.totalorder %s135, %s136
      %p145 = scmp.eq.s32.totalorder %s19, 0
      %p146 = por %p144, %p145
      %p147 = scmp.ne.s32.totalorder %s135, %s136
      %p148 = scmp.eq.s32.totalorder %s20, 1
      %p149 = por %p147, %p148
      %p151 = scmp.ne.s32.totalorder %s136, %s150
      %p152 = scmp.eq.s32.totalorder %s20, 0
      %p153 = por %p151, %p152
      %s154 = ssub.s32 %s21, %s33
      %p155 = scmp.eq.s32.totalorder %s154, 0
      %s157 = sadd.s32 %s156, 1
      %s158 = scalar_select %p155, %s156, %s157
      %p161 = pneg %p155
      %p162 = scmp.eq.s32.totalorder %s14, 1
      %p163 = por %p161, %p162
      %p164 = scmp.ne.s32.totalorder %s156, %s159
      %p165 = scmp.eq.s32.totalorder %s14, 0
      %p166 = por %p164, %p165
      %p167 = scmp.ne.s32.totalorder %s156, %s159
      %p168 = scmp.eq.s32.totalorder %s19, 1
      %p169 = por %p167, %p168
      %p170 = scmp.ne.s32.totalorder %s159, %s160
      %p171 = scmp.eq.s32.totalorder %s19, 0
      %p172 = por %p170, %p171
      %p173 = scmp.ne.s32.totalorder %s159, %s160
      %p174 = scmp.eq.s32.totalorder %s20, 1
      %p175 = por %p173, %p174
      %p177 = scmp.ne.s32.totalorder %s160, %s176
      %p178 = scmp.eq.s32.totalorder %s20, 0
      %p179 = por %p177, %p178
      %p180 = scmp.le.s32.totalorder 1, %s14
      %p181 = scmp.lt.s32.totalorder %s14, 3
      %p182 = pnand %p180, %p181
      %p183 = pneg %p182
      // Predicated region
      $region9: #{tpu_custom_call.1} parent=5 // pred_check
        _
      $region10: #{tpu_custom_call.1} parent=5 // pred_check_branch
        %185 = sbr.rel (%p182) target = $region12
      $region11: #{tpu_custom_call.1} parent=5 // pred_region
        %s186 = ssub.s32 %s14, 1
        // Predicated region
        $region13: #{tpu_custom_call.1} parent=11 // pred_check
          %p187 = pneg %p78
        $region14: #{tpu_custom_call.1} parent=11 // pred_check_branch
          %189 = sbr.rel (%p187) target = $region16
        $region15: #{tpu_custom_call.1} parent=11 // pred_region
          %p190 = scmp.lt.s32.totalorder %s24, 0
          %s191 = scalar_select %p190, %s24, 0
          %s192 = smul.addr %s191, 8
          %s193 = scalar_lea.vmem %s1, %s192
        $region16: #{tpu_custom_call.1} parent=11 // pred_fallthru
          _
        // Predicated region
        $region17: #{tpu_custom_call.1} parent=11 // pred_check
          %p194 = pneg %p99
        $region18: #{tpu_custom_call.1} parent=11 // pred_check_branch
          %196 = sbr.rel (%p194) target = $region20
        $region19: #{tpu_custom_call.1} parent=11 // pred_region
          _
        $region20: #{tpu_custom_call.1} parent=11 // pred_fallthru
          _
        // Predicated region
        $region21: #{tpu_custom_call.1} parent=11 // pred_check
          %p197 = pneg %p125
        $region22: #{tpu_custom_call.1} parent=11 // pred_check_branch
          %199 = sbr.rel (%p197) target = $region24
        $region23: #{tpu_custom_call.1} parent=11 // pred_region
          %s200 = smul.u32 8, %s24
          %p201 = scmp.lt.s32.totalorder %s200, 7
          %s202 = scalar_select %p201, %s200, 7
          %s203 = smul.addr %s202, 8
          %s204 = scalar_lea.vmem %s3, %s203
          %s205 = smul.u32 8, %s24
        $region24: #{tpu_custom_call.1} parent=11 // pred_fallthru
          _
        // Predicated region
        $region25: #{tpu_custom_call.1} parent=11 // pred_check
          %p206 = pneg %p146
        $region26: #{tpu_custom_call.1} parent=11 // pred_check_branch
          %208 = sbr.rel (%p206) target = $region28
        $region27: #{tpu_custom_call.1} parent=11 // pred_region
          _
        $region28: #{tpu_custom_call.1} parent=11 // pred_fallthru
          _
      $region12: #{tpu_custom_call.1} parent=5 // pred_fallthru
        _
      %p209 = scmp.lt.s32.totalorder %s14, 2
      // Predicated region
      $region29: #{tpu_custom_call.1} parent=5 // pred_check
        %p210 = pneg %p209
      $region30: #{tpu_custom_call.1} parent=5 // pred_check_branch
        %212 = sbr.rel (%p210) target = $region32
      $region31: #{tpu_custom_call.1} parent=5 // pred_region
        // Predicated region
        $region33: #{tpu_custom_call.1} parent=31 // pred_check
          %p213 = pneg %p46
        $region34: #{tpu_custom_call.1} parent=31 // pred_check_branch
          %215 = sbr.rel (%p213) target = $region36
        $region35: #{tpu_custom_call.1} parent=31 // pred_region
          %p216 = scmp.lt.s32.totalorder %s21, 1
          %s217 = scalar_select %p216, %s21, 1
          %s218 = smul.addr %s217, 8
          %s219 = scalar_lea.vmem %s0, %s218
        $region36: #{tpu_custom_call.1} parent=31 // pred_fallthru
          _
      $region32: #{tpu_custom_call.1} parent=5 // pred_fallthru
        _
      %p220 = scmp.le.s32.totalorder 1, %s14
      %p221 = scmp.lt.s32.totalorder %s14, 3
      %p222 = pnand %p220, %p221
      %p223 = pneg %p222
      // Predicated region
      $region37: #{tpu_custom_call.1} parent=5 // pred_check
        _
      $region38: #{tpu_custom_call.1} parent=5 // pred_check_branch
        %225 = sbr.rel (%p222) target = $region40
      $region39: #{tpu_custom_call.1} parent=5 // pred_region
        %s226 = ssub.s32 %s14, 1
        %p227 = scmp.lt.s32.totalorder %s23, 1
        %s228 = scalar_select %p227, %s23, 1
        %s229 = smul.addr %s228, 8
        %s230 = scalar_lea.vmem %s0, %s229
        %p231 = pneg %p52
        %p232 = pneg %p49
        %p233 = scmp.lt.s32.totalorder %s24, 0
        %s234 = scalar_select %p233, %s24, 0
        %s235 = smul.addr %s234, 8
        %s236 = scalar_lea.vmem %s1, %s235
        %p237 = pneg %p78
        %p238 = pneg %p75
        %p239 = pneg %p99
        %p240 = pneg %p96
        %s241 = smul.u32 8, %s24
        %p242 = scmp.lt.s32.totalorder %s241, 7
        %s243 = scalar_select %p242, %s241, 7
        %s244 = smul.addr %s243, 8
        %s245 = scalar_lea.vmem %s3, %s244
        %p246 = pneg %p125
        %p247 = pneg %p122
        %p248 = pneg %p146
        %p249 = pneg %p143
        %p250 = pneg %p172
        %p251 = pneg %p169
        %s252 = sand.u32 %s159, 1
        %s253 = scalar_lea.sflag [#allocation4], %s252
        %s254 = sand.u32 %s159, 1
        %s255 = smul.addr %s254, 8
        %s256 = scalar_lea.vmem [#allocation3], %s255
        %p257 = scmp.lt.s32.totalorder %s23, 1
        %s258 = scalar_select %p257, %s23, 1
        %s259 = smul.addr %s258, 8
        %s260 = scalar_lea.vmem %s0, %s259
        %p261 = scmp.lt.s32.totalorder %s24, 0
        %s262 = scalar_select %p261, %s24, 0
        %s263 = smul.addr %s262, 8
        %s264 = scalar_lea.vmem %s1, %s263
        %s265 = smul.u32 8, %s24
        %p266 = scmp.lt.s32.totalorder %s265, 7
        %s267 = scalar_select %p266, %s265, 7
        %s268 = smul.addr %s267, 8
        %s269 = scalar_lea.vmem %s3, %s268
        %s270 = smul.u32 8, %s24
        %p271 = scmp.eq.s32.totalorder %s24, 0
        // Predicated region
        $region41: #{tpu_custom_call.1} parent=39 // pred_check
          %p272 = pneg %p271
        $region42: #{tpu_custom_call.1} parent=39 // pred_check_branch
          %274 = sbr.rel (%p272) target = $region44
        $region43: #{tpu_custom_call.1} parent=39 // pred_region
          %v275 = vld [vmem:[%s4] sm:$0x1]
          %v277 = vlaneseq
          %v278 = vshrl.u32 %v277, 7
          %v279 = vsub.s32 0, %v278
          %v280 = vrot.slane %v275, %v279
          %vm282 = vcmask 261120
          %283 = vst.msk [vmem:[#allocation2] sm:$0xff] %vm282, %v280
        $region44: #{tpu_custom_call.1} parent=39 // pred_fallthru
          _
        %v284 = vld [vmem:[%s260] sm:$0xff]
        %v285 = vld [vmem:[%s264] sm:$0xff]
        %v286 = vld [vmem:[%s264 + $0x8] sm:$0xff]
        %v287 = vld [vmem:[%s264 + $0x10] sm:$0xff]
        %v288 = vld [vmem:[%s264 + $0x18] sm:$0xff]
        %v289 = vld [vmem:[%s2] sm:$0x1]
        %v291 = vlaneseq
        %v292 = vshrl.u32 %v291, 7
        %v293 = vsub.s32 0, %v292
        %v294 = vrot.slane %v289, %v293
        %vm296 = vcmask 261120
        %v298 = vsel %vm296, %v284, 0
        %300 = vmatprep.subr.mxu0 0.0
        %301 = vmatpush1.msra.mxu0 %v285
        %302 = vmatprep.subr.mxu0 0.0
        %303 = vmatpush1.msra.mxu0 %v286
        %304 = vmatprep.subr.mxu0 0.0
        %305 = vmatpush1.msra.mxu0 %v287
        %306 = vmatprep.subr.mxu0 0.0
        %307 = vmatpush1.msra.mxu0 %v288
        %308 = vmatprep.subr.mxu0 0.0
        %309 = vmatpush1.msra.mxu0 0.0
        %310 = vmatprep.subr.mxu0 0.0
        %311 = vmatpush1.msra.mxu0 0.0
        %312 = vmatprep.subr.mxu0 0.0
        %313 = vmatpush1.msra.mxu0 0.0
        %314 = vmatprep.subr.mxu0 0.0
        %315 = vmatpush1.msra.mxu0 0.0
        %316 = vmatprep.subr.mxu0 0.0
        %317 = vmatpush1.msra.mxu0 0.0
        %318 = vmatprep.subr.mxu0 0.0
        %319 = vmatpush1.msra.mxu0 0.0
        %320 = vmatprep.subr.mxu0 0.0
        %321 = vmatpush1.msra.mxu0 0.0
        %322 = vmatprep.subr.mxu0 0.0
        %323 = vmatpush1.msra.mxu0 0.0
        %324 = vmatprep.subr.mxu0 0.0
        %325 = vmatpush1.msra.mxu0 0.0
        %326 = vmatprep.subr.mxu0 0.0
        %327 = vmatpush1.msra.mxu0 0.0
        %328 = vmatprep.subr.mxu0 0.0
        %329 = vmatpush1.msra.mxu0 0.0
        %330 = vmatprep.subr.mxu0 0.0
        %331 = vmatpush1.msra.mxu0 0.0
        %332 = vmatprep.subr.mxu0 0.0
        %333 = vmatpush1.msra.mxu0 0.0
        %334 = vmatprep.subr.mxu0 0.0
        %335 = vmatpush1.msra.mxu0 0.0
        %336 = vmatprep.subr.mxu0 0.0
        %337 = vmatpush1.msra.mxu0 0.0
        %338 = vmatprep.subr.mxu0 0.0
        %339 = vmatpush1.msra.mxu0 0.0
        %340 = vmatprep.subr.mxu0 0.0
        %341 = vmatpush1.msra.mxu0 0.0
        %342 = vmatprep.subr.mxu0 0.0
        %343 = vmatpush1.msra.mxu0 0.0
        %344 = vmatprep.subr.mxu0 0.0
        %345 = vmatpush1.msra.mxu0 0.0
        %346 = vmatprep.subr.mxu0 0.0
        %347 = vmatpush1.msra.mxu0 0.0
        %348 = vmatprep.subr.mxu0 0.0
        %349 = vmatpush1.msra.mxu0 0.0
        %350 = vmatprep.subr.mxu0 0.0
        %351 = vmatpush1.msra.mxu0 0.0
        %352 = vmatprep.subr.mxu0 0.0
        %353 = vmatpush1.msra.mxu0 0.0
        %354 = vmatprep.subr.mxu0 0.0
        %355 = vmatpush1.msra.mxu0 0.0
        %356 = vmatprep.subr.mxu0 0.0
        %357 = vmatpush1.msra.mxu0 0.0
        %358 = vmatprep.subr.mxu0 0.0
        %359 = vmatpush1.msra.mxu0 0.0
        %360 = vmatprep.subr.mxu0 0.0
        %361 = vmatpush1.msra.mxu0 0.0
        %362 = vmatprep.subr.mxu0 0.0
        %363 = vmatpush1.msra.mxu0 0.0
        %364 = vmatprep.mubr.f32.mxu0 0.0
        %365 = vmatmul.mubr.f32.gmra.mrb[0].mxu0 %v298
        %v366 = vpop.f32.mrb[0].mxu0
        %v367 = vadd.f32 %v294, %v366
        %v368 = vpop.f32.mrb[0].mxu0
        %369 = vdwg.mxu0
        %v370 = vmul.f32 %v367, 0.5
        %v371 = vmul.f32 %v367, 0.70710677
        %v372 = verf.f32.pop %v371
        %v373 = vadd.f32 %v372, 1.0
        %v374 = vmul.f32 %v370, %v373
        %v375 = vld [vmem:[#allocation2] sm:$0xff]
        %v376 = vld [vmem:[%s269] sm:$0xff]
        %v377 = vld [vmem:[%s269 + $0x8] sm:$0xff]
        %v378 = vld [vmem:[%s269 + $0x10] sm:$0xff]
        %v379 = vld [vmem:[%s269 + $0x18] sm:$0xff]
        %v380 = vld [vmem:[%s269 + $0x20] sm:$0xff]
        %v381 = vld [vmem:[%s269 + $0x28] sm:$0xff]
        %v382 = vld [vmem:[%s269 + $0x30] sm:$0xff]
        %v383 = vld [vmem:[%s269 + $0x38] sm:$0xff]
        %vm384 = vcmask 523264
        %v386 = vsel %vm384, %v374, 0
        %388 = vmatprep.subr.mxu0 0.0
        %389 = vmatpush1.msra.mxu0 %v376
        %390 = vmatprep.subr.mxu0 0.0
        %391 = vmatpush1.msra.mxu0 %v377
        %392 = vmatprep.subr.mxu0 0.0
        %393 = vmatpush1.msra.mxu0 %v378
        %394 = vmatprep.subr.mxu0 0.0
        %395 = vmatpush1.msra.mxu0 %v379
        %396 = vmatprep.subr.mxu0 0.0
        %397 = vmatpush1.msra.mxu0 %v380
        %398 = vmatprep.subr.mxu0 0.0
        %399 = vmatpush1.msra.mxu0 %v381
        %400 = vmatprep.subr.mxu0 0.0
        %401 = vmatpush1.msra.mxu0 %v382
        %402 = vmatprep.subr.mxu0 0.0
        %403 = vmatpush1.msra.mxu0 %v383
        %404 = vmatprep.subr.mxu0 0.0
        %405 = vmatpush1.msra.mxu0 0.0
        %406 = vmatprep.subr.mxu0 0.0
        %407 = vmatpush1.msra.mxu0 0.0
        %408 = vmatprep.subr.mxu0 0.0
        %409 = vmatpush1.msra.mxu0 0.0
        %410 = vmatprep.subr.mxu0 0.0
        %411 = vmatpush1.msra.mxu0 0.0
        %412 = vmatprep.subr.mxu0 0.0
        %413 = vmatpush1.msra.mxu0 0.0
        %414 = vmatprep.subr.mxu0 0.0
        %415 = vmatpush1.msra.mxu0 0.0
        %416 = vmatprep.subr.mxu0 0.0
        %417 = vmatpush1.msra.mxu0 0.0
        %418 = vmatprep.subr.mxu0 0.0
        %419 = vmatpush1.msra.mxu0 0.0
        %420 = vmatprep.subr.mxu0 0.0
        %421 = vmatpush1.msra.mxu0 0.0
        %422 = vmatprep.subr.mxu0 0.0
        %423 = vmatpush1.msra.mxu0 0.0
        %424 = vmatprep.subr.mxu0 0.0
        %425 = vmatpush1.msra.mxu0 0.0
        %426 = vmatprep.subr.mxu0 0.0
        %427 = vmatpush1.msra.mxu0 0.0
        %428 = vmatprep.subr.mxu0 0.0
        %429 = vmatpush1.msra.mxu0 0.0
        %430 = vmatprep.subr.mxu0 0.0
        %431 = vmatpush1.msra.mxu0 0.0
        %432 = vmatprep.subr.mxu0 0.0
        %433 = vmatpush1.msra.mxu0 0.0
        %434 = vmatprep.subr.mxu0 0.0
        %435 = vmatpush1.msra.mxu0 0.0
        %436 = vmatprep.subr.mxu0 0.0
        %437 = vmatpush1.msra.mxu0 0.0
        %438 = vmatprep.subr.mxu0 0.0
        %439 = vmatpush1.msra.mxu0 0.0
        %440 = vmatprep.subr.mxu0 0.0
        %441 = vmatpush1.msra.mxu0 0.0
        %442 = vmatprep.subr.mxu0 0.0
        %443 = vmatpush1.msra.mxu0 0.0
        %444 = vmatprep.subr.mxu0 0.0
        %445 = vmatpush1.msra.mxu0 0.0
        %446 = vmatprep.subr.mxu0 0.0
        %447 = vmatpush1.msra.mxu0 0.0
        %448 = vmatprep.subr.mxu0 0.0
        %449 = vmatpush1.msra.mxu0 0.0
        %450 = vmatprep.subr.mxu0 0.0
        %451 = vmatpush1.msra.mxu0 0.0
        %452 = vmatprep.mubr.f32.mxu0 0.0
        %453 = vmatmul.mubr.f32.gmra.mrb[0].mxu0 %v386
        %v454 = vpop.f32.mrb[0].mxu0
        %v455 = vadd.f32 0.0, %v454
        %v456 = vpop.f32.mrb[0].mxu0
        %457 = vdwg.mxu0
        %v458 = vadd.f32 %v375, %v455
        %459 = vst.msk [vmem:[#allocation2] sm:$0xff] %vm296, %v458
        // Predicated region
        $region45: #{tpu_custom_call.1} parent=39 // pred_check
          %p460 = pneg %p271
        $region46: #{tpu_custom_call.1} parent=39 // pred_check_branch
          %462 = sbr.rel (%p460) target = $region48
        $region47: #{tpu_custom_call.1} parent=39 // pred_region
          %v463 = vld [vmem:[#allocation2] sm:$0xff]
          %464 = vst.msk [vmem:[%s256] sm:$0xff] %vm296, %v463
        $region48: #{tpu_custom_call.1} parent=39 // pred_fallthru
          _
        %s465 = sand.u32 %s159, 1
        %s466 = scalar_lea.sflag [#allocation4], %s465
        %s467 = sand.u32 %s159, 1
        %s468 = smul.addr %s467, 8
        %s469 = scalar_lea.vmem [#allocation3], %s468
        // Predicated region
        $region49: #{tpu_custom_call.1} parent=39 // pred_check
          %p470 = pneg %p169
        $region50: #{tpu_custom_call.1} parent=39 // pred_check_branch
          %472 = sbr.rel (%p470) target = $region52
        $region51: #{tpu_custom_call.1} parent=39 // pred_region
          %s474 = ssub.s32 128, 128
          %475 = vsyncadd %s466, %s474
          %s476 = smul.addr %s23, 128
          %s477 = scalar_lea.hbm %s5, %s476
          %s479 = sshll.u32 %s469, 4
          %s480 = int_to_ptr.vmem [resolvable:$true] %s479
          %482 = dma.vmem_to_hbm [thread:$0]  %s480, 128, %s477, %s466
        $region52: #{tpu_custom_call.1} parent=39 // pred_fallthru
          _
      $region40: #{tpu_custom_call.1} parent=5 // pred_fallthru
        _
      %p483 = scmp.le.s32.totalorder 2, %s14
      // Predicated region
      $region53: #{tpu_custom_call.1} parent=5 // pred_check
        %p484 = pneg %p483
      $region54: #{tpu_custom_call.1} parent=5 // pred_check_branch
        %486 = sbr.rel (%p484) target = $region56
      $region55: #{tpu_custom_call.1} parent=5 // pred_region
        %s487 = ssub.s32 %s14, 2
        // Predicated region
        $region57: #{tpu_custom_call.1} parent=55 // pred_check
          %p488 = pneg %p175
        $region58: #{tpu_custom_call.1} parent=55 // pred_check_branch
          %490 = sbr.rel (%p488) target = $region60
        $region59: #{tpu_custom_call.1} parent=55 // pred_region
          %s491 = sand.u32 %s160, 1
          %s492 = scalar_lea.sflag [#allocation4], %s491
          %s493 = sand.u32 %s160, 1
          %s494 = smul.addr %s493, 8
          %s495 = scalar_lea.vmem [#allocation3], %s494
          %496 = dma.done %s492, 128
        $region60: #{tpu_custom_call.1} parent=55 // pred_fallthru
          _
      $region56: #{tpu_custom_call.1} parent=5 // pred_fallthru
        _
    $region6: #{tpu_custom_call.1} parent=1 // loop_footer
      %s18 = sadd.s32 1, %s14
    $region7: #{tpu_custom_call.1} parent=1 // loop_footer_branch
      %13 = sbr.rel target = $region3
    $region8: #{tpu_custom_call.1} parent=1 // loop_exit
      _
    %497 = vsyncpa [#allocation4], 1
    %s498 = scalar_lea.sflag [#allocation4], 1
    %499 = vsyncpa %s498, 1

</llo_original>
